<compile_context>
chip_gen: v5e
topology: v5e:2x2
jax: 0.10.0
libtpu: 0.0.40
codegen_flags: <defaults>
</compile_context>

<pallas_src>
import jax
import jax.numpy as jnp
from jax import lax
from jax.experimental import pallas as pl
from jax.experimental.pallas import tpu as pltpu

_LANES = 128
_MAX_TILE_ROWS = 2048   # 2048 * 128 * 4B = 1 MiB per f32 input block


# -------------------- kernels --------------------

def _make_sum_small_kernel(weighted):
    """Single-block sum((p - t)^2 [* w]) -> (1, 1) output."""
    def kernel(*refs):
        if weighted:
            p_ref, t_ref, w_ref, o_ref = refs
        else:
            p_ref, t_ref, o_ref = refs
        d = p_ref[...].astype(jnp.float32) - t_ref[...].astype(jnp.float32)
        sq = d * d
        if weighted:
            sq = sq * w_ref[...].astype(jnp.float32)
        o_ref[...] = jnp.zeros_like(o_ref) + jnp.sum(sq)
    return kernel


def _make_sum_tiled_kernel(weighted, total_rows, tile_rows):
    """Per-tile (8, 128) partial sums of (p - t)^2 [* w]; fully parallel grid."""
    needs_mask = (total_rows % tile_rows) != 0

    def kernel(*refs):
        if weighted:
            p_ref, t_ref, w_ref, o_ref = refs
        else:
            p_ref, t_ref, o_ref = refs
        d = p_ref[...].astype(jnp.float32) - t_ref[...].astype(jnp.float32)
        sq = d * d
        if weighted:
            sq = sq * w_ref[...].astype(jnp.float32)
        if needs_mask:
            # Zero out the out-of-bounds rows of the (partial) final block.
            i = pl.program_id(0)
            row = i * tile_rows + lax.broadcasted_iota(jnp.int32, sq.shape, 0)
            sq = jnp.where(row < total_rows, sq, 0.0)
        # (tile_rows, 128) -> (8, 128) via pure vreg adds (no per-step XLU /
        # cross-lane reduce, no masked (1,1) store on the hot path).
        o_ref[...] = jnp.sum(sq.reshape(tile_rows // 8, 8, _LANES), axis=0)
    return kernel


def _make_elem_kernel(weighted):
    """Elementwise (p - t)^2 [* w] (reduction='none')."""
    def kernel(*refs):
        if weighted:
            p_ref, t_ref, w_ref, o_ref = refs
        else:
            p_ref, t_ref, o_ref = refs
        d = p_ref[...].astype(jnp.float32) - t_ref[...].astype(jnp.float32)
        sq = d * d
        if weighted:
            sq = sq * w_ref[...].astype(jnp.float32)
        o_ref[...] = sq.astype(o_ref.dtype)
    return kernel


# -------------------- pallas_call wrappers --------------------

def _prep_2d(x):
    """Flatten to a lane-dense (R, 128) slab. Zero-pads (copy) only when
    numel % 128 != 0; otherwise the reshape is layout-only under jit."""
    flat = x.reshape(-1)
    n = flat.shape[0]
    rem = n % _LANES
    if rem:
        flat = jnp.pad(flat, (0, _LANES - rem))
    return flat.reshape(-1, _LANES)


def _sum_sq(pred2d, target2d, weight2d):
    """sum((pred - target)^2 [* weight]) as an f32 scalar."""
    R = pred2d.shape[0]
    weighted = weight2d is not None
    inputs = (pred2d, target2d) + ((weight2d,) if weighted else ())

    if R <= _MAX_TILE_ROWS:
        # Small input: one full-array block, direct (1,1) reduction.
        full_spec = pl.BlockSpec((R, _LANES), lambda i: (0, 0))
        out = pl.pallas_call(
            _make_sum_small_kernel(weighted),
            out_shape=jax.ShapeDtypeStruct((1, 1), jnp.float32),
            grid_spec=pltpu.PrefetchScalarGridSpec(
                num_scalar_prefetch=0,
                grid=(1,),
                in_specs=[full_spec] * len(inputs),
                out_specs=pl.BlockSpec((1, 1), lambda i: (0, 0)),
            ),
            compiler_params=pltpu.CompilerParams(
                dimension_semantics=("arbitrary",)),
        )(*inputs)
        return out[0, 0]

    tile = _MAX_TILE_ROWS
    grid = (R + tile - 1) // tile
    in_spec = pl.BlockSpec((tile, _LANES), lambda i: (i, 0))
    partials = pl.pallas_call(
        _make_sum_tiled_kernel(weighted, R, tile),
        out_shape=jax.ShapeDtypeStruct((grid * 8, _LANES), jnp.float32),
        grid_spec=pltpu.PrefetchScalarGridSpec(
            num_scalar_prefetch=0,
            grid=(grid,),
            in_specs=[in_spec] * len(inputs),
            out_specs=pl.BlockSpec((8, _LANES), lambda i: (i, 0)),
        ),
        compiler_params=pltpu.CompilerParams(
            dimension_semantics=("parallel",)),
    )(*inputs)
    # Tiny (grid*8, 128) partial array; final reduce in XLA.
    return jnp.sum(partials)


def _elem_sq(pred2d, target2d, weight2d, out_dtype):
    """(pred - target)^2 [* weight] elementwise, lane-dense (R, 128) output."""
    R = pred2d.shape[0]
    weighted = weight2d is not None
    inputs = (pred2d, target2d) + ((weight2d,) if weighted else ())

    tile = R if R <= _MAX_TILE_ROWS else _MAX_TILE_ROWS
    grid = (R + tile - 1) // tile
    spec = pl.BlockSpec((tile, _LANES), lambda i: (i, 0))
    return pl.pallas_call(
        _make_elem_kernel(weighted),
        out_shape=jax.ShapeDtypeStruct((R, _LANES), out_dtype),
        grid_spec=pltpu.PrefetchScalarGridSpec(
            num_scalar_prefetch=0,
            grid=(grid,),
            in_specs=[spec] * len(inputs),
            out_specs=spec,
        ),
        compiler_params=pltpu.CompilerParams(
            dimension_semantics=("parallel",)),
    )(*inputs)


# -------------------- jitted top-level paths --------------------

@jax.jit
def _mse_sum(pred, target, weight):
    p2d = _prep_2d(pred)
    t2d = _prep_2d(target)
    if weight is not None:
        w2d = _prep_2d(jnp.broadcast_to(jnp.asarray(weight), pred.shape))
    else:
        w2d = None
    return _sum_sq(p2d, t2d, w2d)


@jax.jit
def _mse_none(pred, target, weight):
    out_dtype = jnp.result_type(pred.dtype, target.dtype)
    p2d = _prep_2d(pred)
    t2d = _prep_2d(target)
    if weight is not None:
        w = jnp.broadcast_to(jnp.asarray(weight), pred.shape)
        out_dtype = jnp.result_type(out_dtype, w.dtype)
        w2d = _prep_2d(w)
    else:
        w2d = None
    loss2d = _elem_sq(p2d, t2d, w2d, out_dtype)
    n = pred.size
    if n % _LANES == 0:
        return loss2d.reshape(pred.shape)          # no padding -> no slice copy
    return loss2d.reshape(-1)[:n].reshape(pred.shape)


# -------------------- module --------------------

class MSELoss:
    """JAX/Pallas port of the mmdet-style MSELoss module."""

    def __init__(self, reduction='mean', loss_weight=1.0):
        assert reduction in ('none', 'mean', 'sum')
        self.reduction = reduction
        self.loss_weight = loss_weight

    def __call__(self, pred, target, weight=None, avg_factor=None):
        pred = jnp.asarray(pred)
        target = jnp.asarray(target)
        if weight is not None:
            weight = jnp.asarray(weight)

        if self.reduction == 'none':
            # mmdet weight_reduce_loss: 'none' returns the (weighted)
            # elementwise loss; avg_factor is ignored in this case.
            return self.loss_weight * _mse_none(pred, target, weight)

        total = _mse_sum(pred, target, weight)
        if avg_factor is None:
            loss = total / pred.size if self.reduction == 'mean' else total
        else:
            if self.reduction == 'mean':
                loss = total / avg_factor
            else:  # 'sum'
                raise ValueError('avg_factor can not be used with reduction="sum"')
        return self.loss_weight * loss


# -------------------- demo / self-check --------------------

if __name__ == "__main__":
    key = jax.random.PRNGKey(0)
    k1, k2, k3, k4, k5, k6 = jax.random.split(key, 6)

    # small NCHW-like shapes (single-block path)
    pred = jax.random.normal(k1, (2, 4, 16, 16), dtype=jnp.float32)
    target = jax.random.normal(k2, (2, 4, 16, 16), dtype=jnp.float32)
    weight = jax.random.uniform(k3, (2, 4, 16, 16), dtype=jnp.float32)

    loss_mod = MSELoss(reduction='mean', loss_weight=1.0)

    out_mean = loss_mod(pred, target)
    jax.block_until_ready(out_mean)
    assert jnp.allclose(out_mean, jnp.mean((pred - target) ** 2),
                        rtol=1e-5, atol=1e-5)

    out_w = loss_mod(pred, target, weight=weight)
    assert jnp.allclose(out_w, jnp.mean((pred - target) ** 2 * weight),
                        rtol=1e-5, atol=1e-5)

    out_af = MSELoss(reduction='mean', loss_weight=2.0)(
        pred, target, weight=weight, avg_factor=100.0)
    assert jnp.allclose(out_af, 2.0 * jnp.sum((pred - target) ** 2 * weight) / 100.0,
                        rtol=1e-5, atol=1e-5)

    out_none = MSELoss(reduction='none')(pred, target, weight=weight)
    assert out_none.shape == pred.shape
    assert jnp.allclose(out_none, (pred - target) ** 2 * weight,
                        rtol=1e-5, atol=1e-5)

    # ragged total (numel % 128 != 0) exercises the zero-pad fallback
    p_odd = jax.random.normal(k4, (2, 3, 7, 5), dtype=jnp.float32)
    t_odd = jax.random.normal(k5, (2, 3, 7, 5), dtype=jnp.float32)
    out_odd = MSELoss(reduction='mean')(p_odd, t_odd)
    assert jnp.allclose(out_odd, jnp.mean((p_odd - t_odd) ** 2),
                        rtol=1e-5, atol=1e-5)

    # larger feature map exercises the tiled (multi-step, masked-tail) path
    kp, kt, kw = jax.random.split(k6, 3)
    p_big = jax.random.normal(kp, (4, 8, 96, 96), dtype=jnp.float32)
    t_big = jax.random.normal(kt, (4, 8, 96, 96), dtype=jnp.float32)
    w_big = jax.random.uniform(kw, (4, 8, 96, 96), dtype=jnp.float32)
    out_big = MSELoss(reduction='mean')(p_big, t_big, weight=w_big)
    jax.block_until_ready(out_big)
    assert jnp.allclose(out_big, jnp.mean((p_big - t_big) ** 2 * w_big),
                        rtol=1e-5, atol=1e-5)

    out_big_none = MSELoss(reduction='none')(p_big, t_big)
    assert out_big_none.shape == p_big.shape
    assert jnp.allclose(out_big_none, (p_big - t_big) ** 2,
                        rtol=1e-5, atol=1e-5)

    # bf16 inputs are streamed as bf16 (half the HBM bytes) and upcast in-kernel
    p_bf = pred.astype(jnp.bfloat16)
    t_bf = target.astype(jnp.bfloat16)
    out_bf = MSELoss(reduction='mean')(p_bf, t_bf)
    ref_bf = jnp.mean((p_bf.astype(jnp.float32) - t_bf.astype(jnp.float32)) ** 2)
    assert jnp.allclose(out_bf, ref_bf, rtol=1e-4, atol=1e-4)

    print("KERNEL_OK")
</pallas_src>

<mosaic_0001>
module attributes {stable_mosaic.version = 11 : i64} {
  func.func @kernel(%arg0: i32, %arg1: memref<16x128xf32, #tpu.memory_space<vmem>>, %arg2: memref<16x128xf32, #tpu.memory_space<vmem>>, %arg3: memref<1x1xf32, #tpu.memory_space<vmem>>) attributes {dimension_semantics = [#tpu.dimension_semantics<arbitrary>], iteration_bounds = array<i64: 1>, scalar_prefetch = 0 : i64, scratch_operands = 0 : i64, tpu.core_type = #tpu.core_type<tc>, window_params = [{pipeline_mode = #tpu.pipeline_mode<synchronous>, transform_indices = @transform_0, window_bounds = array<i64: 16, 128>}, {pipeline_mode = #tpu.pipeline_mode<synchronous>, transform_indices = @transform_1, window_bounds = array<i64: 16, 128>}, {pipeline_mode = #tpu.pipeline_mode<synchronous>, transform_indices = @transform_2, window_bounds = array<i64: 1, 1>}]} {
    %c0 = arith.constant 0 : index
    %c0_0 = arith.constant 0 : index
    %0 = vector.load %arg1[%c0, %c0_0] : memref<16x128xf32, #tpu.memory_space<vmem>>, vector<16x128xf32>
    %c0_1 = arith.constant 0 : index
    %c0_2 = arith.constant 0 : index
    %1 = vector.load %arg2[%c0_1, %c0_2] : memref<16x128xf32, #tpu.memory_space<vmem>>, vector<16x128xf32>
    %2 = arith.subf %0, %1 : vector<16x128xf32>
    %3 = arith.mulf %2, %2 : vector<16x128xf32>
    %cst = arith.constant 0.000000e+00 : f32
    %4 = vector.broadcast %cst : f32 to vector<1x1xf32>
    %5 = vector.shape_cast %3 : vector<16x128xf32> to vector<1x16x128xf32>
    %cst_3 = arith.constant dense<0.000000e+00> : vector<1xf32>
    %6 = vector.multi_reduction <add>, %5, %cst_3 [1, 2] : vector<1x16x128xf32> to vector<1xf32>
    %7 = vector.shape_cast %6 : vector<1xf32> to vector<1x1x1xf32>
    %8 = vector.extract %7[0, 0, 0] : f32 from vector<1x1x1xf32>
    %9 = vector.broadcast %8 : f32 to vector<1x1xf32>
    %10 = arith.addf %4, %9 : vector<1x1xf32>
    %c0_4 = arith.constant 0 : index
    %c0_5 = arith.constant 0 : index
    %11 = vector.load %arg3[%c0_4, %c0_5] : memref<1x1xf32, #tpu.memory_space<vmem>>, vector<1x1xf32>
    tpu.vector_store %arg3[%c0_4, %c0_5], %10 {strides = array<i32>} : memref<1x1xf32, #tpu.memory_space<vmem>>, vector<1x1xf32>,
    return
  }
  func.func @transform_0(%arg0: i32) -> (i32, i32) {
    %c0_i32 = arith.constant 0 : i32
    %c0_i32_0 = arith.constant 0 : i32
    %c0_i32_1 = arith.constant 0 : i32
    return %c0_i32, %c0_i32_0 : i32, i32
  }
  func.func @transform_1(%arg0: i32) -> (i32, i32) {
    %c0_i32 = arith.constant 0 : i32
    %c0_i32_0 = arith.constant 0 : i32
    %c0_i32_1 = arith.constant 0 : i32
    return %c0_i32, %c0_i32_0 : i32, i32
  }
  func.func @transform_2(%arg0: i32) -> (i32, i32) {
    %c0_i32 = arith.constant 0 : i32
    %c0_i32_0 = arith.constant 0 : i32
    %c0_i32_1 = arith.constant 0 : i32
    return %c0_i32, %c0_i32_0 : i32, i32
  }
}

</mosaic_0001>

<llo_original>
// kernel: _mse_sum.1
$region0: #{_mse_sum.1}
  #allocation0 [shape = 'u32[]', space=smem, size = 0x4, offset = 0x4, fixed_abs, tag = 'smem constant byte address 0x4 - core index']
  #allocation1 [shape = 'u32[72,128]{1,0:T(1,128)}', space=vmem, size = 0x9000, scoped, tag = 'internal scratch']
  %s0 = inlined_call_operand.vmem [shape: f32[16,128], index: 0, kind: input, shape index: {}]
  %s1 = inlined_call_operand.vmem [shape: f32[16,128], index: 1, kind: input, shape index: {}]
  %s2 = inlined_call_operand.hbm [shape: f32[1,1], index: 2, kind: output, shape index: {}]
  %s3 = sld [smem:[#allocation0]]
  $region18: #{_mse_sum.1} parent=0
    _
  %s5 = ssub.s32 1, %s3
  %s6 = scalar_select 0, %s5, %s3
  $region1: #{_mse_sum.1} parent=0
    #allocation2 [shape = 'u8[512]{0}', space=vmem, size = 0x400, scoped, tag = 'output window, operand 0, single buffered']
    #allocation3 [shape = 's32[1]{0}', space=sflag, size = 0x4, scoped, tag = 'scoped memory for _mse_sum.1']
    %7 = vsyncpa [#allocation3], 0
    // Predicated region
    $region2: #{_mse_sum.1} parent=1 // pred_check
      _
    $region3: #{_mse_sum.1} parent=1 // pred_check_branch
      %9 = sbr.rel (0) target = $region5
    $region4: #{_mse_sum.1} parent=1 // pred_region
      _
    $region5: #{_mse_sum.1} parent=1 // pred_fallthru
      _
    // Predicated region
    $region6: #{_mse_sum.1} parent=1 // pred_check
      _
    $region7: #{_mse_sum.1} parent=1 // pred_check_branch
      %11 = sbr.rel (0) target = $region9
    $region8: #{_mse_sum.1} parent=1 // pred_region
      _
    $region9: #{_mse_sum.1} parent=1 // pred_fallthru
      _
    %v12 = vld [vmem:[%s0] sm:$0xff]
    %v13 = vld [vmem:[%s0 + $0x8] sm:$0xff]
    %v14 = vld [vmem:[%s1] sm:$0xff]
    %v15 = vld [vmem:[%s1 + $0x8] sm:$0xff]
    %v16 = vsub.f32 %v12, %v14
    %v17 = vsub.f32 %v13, %v15
    %v18 = vmul.f32 %v16, %v16
    %v19 = vmul.f32 %v17, %v17
    %v20 = vadd.f32 %v18, %v19
    %21 = vadd.xlane.f32.xlu0 %v20
    %v22 = vpop.xlane.xlu0 %21
    %v23 = vrot.slane %v22, 4
    %v24 = vadd.f32 %v22, %v23
    %v25 = vrot.slane %v24, 2
    %v26 = vadd.f32 %v24, %v25
    %v27 = vrot.slane %v26, 1
    %v28 = vadd.f32 %v26, %v27
    %s29 = vtos %v28
    %v30 = vstv %s29
    %v31 = vadd.f32 %v30, 0.0
    %vm32 = vcmask 0
    %33 = vst.msk [vmem:[#allocation2] sm:$0x1] %vm32, %v31
    // Predicated region
    $region10: #{_mse_sum.1} parent=1 // pred_check
      _
    $region11: #{_mse_sum.1} parent=1 // pred_check_branch
      %35 = sbr.rel (0) target = $region13
    $region12: #{_mse_sum.1} parent=1 // pred_region
      %37 = vsyncadd [#allocation3], 0
      %s39 = sshll.u32 [#allocation2], 4
      %s40 = int_to_ptr.vmem [resolvable:$true] %s39
      %s41 = sshll.u32 %s2, 4
      %s42 = int_to_ptr.hbm [resolvable:$true] %s41
      %44 = dma.vmem_to_hbm [thread:$0]  %s40, 16, %s42, [#allocation3]
    $region13: #{_mse_sum.1} parent=1 // pred_fallthru
      _
    // Predicated region
    $region14: #{_mse_sum.1} parent=1 // pred_check
      _
    $region15: #{_mse_sum.1} parent=1 // pred_check_branch
      %46 = sbr.rel (0) target = $region17
    $region16: #{_mse_sum.1} parent=1 // pred_region
      %48 = dma.done [#allocation3], 16
    $region17: #{_mse_sum.1} parent=1 // pred_fallthru
      _
    %49 = vsyncpa [#allocation3], 1

</llo_original>
